<compile_context>
chip_gen: v7x
topology: tpu7x:2x2x1
jax: 0.10.0
libtpu: 0.0.40
codegen_flags: <defaults>
</compile_context>

<pallas_src>
import jax
import jax.numpy as jnp
from jax import lax
from jax.experimental import pallas as pl
from jax.experimental.pallas import tpu as pltpu


TILE_B_MAX = 4096  # batch-tile upper bound (multiple of 128 once batch > 256)


def policy_kernel(x_ref, w1_ref, b1_ref, w2_ref, b2_ref,
                  w3_ref, b3_ref, w4_ref, b4_ref, out_ref):
    # x block: (tile_b, input_size) f32 -> bf16 in-kernel (cheap VPU op,
    # hidden under the pipeline; avoids an extra HBM pass in the wrapper).
    x_bf = x_ref[...].astype(jnp.bfloat16)

    # Feature-major chain: activations are (features, tile_b), batch on lanes.
    # First layer contracts x's feature axis directly (A @ B^T), so no
    # explicit transpose of x is needed.
    h = lax.dot_general(w1_ref[...], x_bf, (((1,), (1,)), ((), ())),
                        preferred_element_type=jnp.float32)
    h = jnp.tanh(h + b1_ref[...])
    h = jnp.tanh(jnp.dot(w2_ref[...], h.astype(jnp.bfloat16),
                         preferred_element_type=jnp.float32) + b2_ref[...])
    h = jnp.tanh(jnp.dot(w3_ref[...], h.astype(jnp.bfloat16),
                         preferred_element_type=jnp.float32) + b3_ref[...])
    logits = jnp.dot(w4_ref[...], h.astype(jnp.bfloat16),
                     preferred_element_type=jnp.float32) + b4_ref[...]

    out_size = logits.shape[0]
    if out_size <= 8:
        # Unrolled max / sum over the tiny feature (sublane) axis: pure VPU
        # ops on lane-dense vregs, keeps the XLU free.
        m = logits[0:1, :]
        for i in range(1, out_size):
            m = jnp.maximum(m, logits[i:i + 1, :])
        e = jnp.exp(logits - m)
        s = e[0:1, :]
        for i in range(1, out_size):
            s = s + e[i:i + 1, :]
    else:
        m = jnp.max(logits, axis=0, keepdims=True)
        e = jnp.exp(logits - m)
        s = jnp.sum(e, axis=0, keepdims=True)

    # Exact divide (not approx reciprocal): downstream samplers / log-probs
    # may assume exact normalization, and this is nowhere near the bottleneck.
    out_ref[...] = e / s


def _round_up(n, m):
    return ((n + m - 1) // m) * m


def _choose_tile_b(batch, tile_b_max):
    """Batch tile on the 128-lane axis of the (transposed) output."""
    if batch <= 256:
        # Single exact tile: block dims equal full array dims -> always legal.
        return batch
    # Multiple of 128 (lane axis), >= 2 grid steps (v7x megacore), and a
    # small remainder on the (masked) last tile.
    tile = _round_up(-(-batch // 2), 128)
    return min(tile, tile_b_max)


def policy_network_forward(x, params, tile_b_max=TILE_B_MAX):
    """x: (B, input_size) float array.

    params: PyTorch-layout weights: w_i (out_features, in_features) and
    biases b_i (out_features, 1).
    Returns (B, output_size) f32 softmax probabilities.
    """
    batch, input_size = x.shape
    output_size = params["w4"].shape[0]

    tile_b = _choose_tile_b(batch, tile_b_max)
    num_tiles = pl.cdiv(batch, tile_b)  # last tile may be partial (masked)

    # Weights fed to the MXU in bf16 (tiny, one-time cast); biases stay f32
    # (added post-accumulation). x stays f32 and is cast inside the kernel.
    w1 = params["w1"].astype(jnp.bfloat16)
    w2 = params["w2"].astype(jnp.bfloat16)
    w3 = params["w3"].astype(jnp.bfloat16)
    w4 = params["w4"].astype(jnp.bfloat16)
    b1, b2, b3, b4 = params["b1"], params["b2"], params["b3"], params["b4"]

    # Weights/biases: constant index_map -> resident in VMEM across all tiles.
    resident = lambda a: pl.BlockSpec(a.shape, lambda i: (0, 0))

    out_t = pl.pallas_call(
        policy_kernel,
        out_shape=jax.ShapeDtypeStruct((output_size, batch), jnp.float32),
        grid=(num_tiles,),
        in_specs=[
            pl.BlockSpec((tile_b, input_size), lambda i: (i, 0)),   # x: streamed
            resident(w1), resident(b1),
            resident(w2), resident(b2),
            resident(w3), resident(b3),
            resident(w4), resident(b4),
        ],
        # Lane-dense output: (output_size, tile_b) with batch on the lane axis.
        out_specs=pl.BlockSpec((output_size, tile_b), lambda i: (0, i)),
        compiler_params=pltpu.CompilerParams(
            dimension_semantics=("parallel",)),   # v7x: shard batch across 2 TCs
    )(x, w1, b1, w2, b2, w3, b3, w4, b4)

    # Undo the feature-major layout (tiny (output_size, batch) transpose).
    return out_t.T


def init_params(key, input_size, output_size):
    """Deterministic init mimicking nn.Linear (uniform +/- 1/sqrt(fan_in)).
    Weights in PyTorch layout (out_features, in_features); biases (out, 1)."""
    dims = [(input_size, 32), (32, 16), (16, 8), (8, output_size)]
    params = {}
    for i, (fan_in, fan_out) in enumerate(dims, start=1):
        key, kw, kb = jax.random.split(key, 3)
        bound = 1.0 / (float(fan_in) ** 0.5)
        params[f"w{i}"] = jax.random.uniform(
            kw, (fan_out, fan_in), jnp.float32, -bound, bound)
        params[f"b{i}"] = jax.random.uniform(
            kb, (fan_out, 1), jnp.float32, -bound, bound)
    return params


def reference_forward(x, params):
    """Pure-JAX reference with the same bf16-matmul / f32-accumulate numerics."""
    h = x.astype(jnp.bfloat16)
    for i in (1, 2, 3):
        w = params[f"w{i}"].astype(jnp.bfloat16)          # (out, in)
        h = jnp.tanh(jnp.dot(h, w.T, preferred_element_type=jnp.float32)
                     + params[f"b{i}"].reshape(1, -1))
        h = h.astype(jnp.bfloat16)
    w4 = params["w4"].astype(jnp.bfloat16)
    logits = (jnp.dot(h, w4.T, preferred_element_type=jnp.float32)
              + params["b4"].reshape(1, -1))
    return jax.nn.softmax(logits, axis=1)


if __name__ == "__main__":
    input_size = 16
    output_size = 4

    key = jax.random.PRNGKey(0)
    key, kp = jax.random.split(key)
    params = init_params(kp, input_size, output_size)

    # Small-shape check (single exact tile).
    batch = 8
    key, kx = jax.random.split(key)
    x = jax.random.normal(kx, (batch, input_size), jnp.float32)

    out = policy_network_forward(x, params)
    jax.block_until_ready(out)
    ref = reference_forward(x, params)
    assert out.shape == (batch, output_size)
    # bf16 matmul inputs -> ~1e-3 level agreement vs the f32 torch module.
    assert jnp.allclose(out, ref, atol=5e-3, rtol=5e-3), "mismatch vs reference"
    assert jnp.allclose(jnp.sum(out, axis=1), 1.0, atol=1e-4), "rows must sum to 1"

    # Multi-tile path with an uneven (masked) last tile, no jnp.pad.
    batch2 = 300
    key, kx2 = jax.random.split(key)
    x2 = jax.random.normal(kx2, (batch2, input_size), jnp.float32)
    out2 = policy_network_forward(x2, params)
    jax.block_until_ready(out2)
    ref2 = reference_forward(x2, params)
    assert out2.shape == (batch2, output_size)
    assert jnp.allclose(out2, ref2, atol=5e-3, rtol=5e-3), "mismatch (tiled path)"
    assert jnp.allclose(jnp.sum(out2, axis=1), 1.0, atol=1e-4), "rows must sum to 1"

    print("KERNEL_OK")
</pallas_src>

<mosaic_0001>
module attributes {stable_mosaic.version = 11 : i64} {
  func.func @policy_kernel(%arg0: i32, %arg1: memref<8x16xf32, #tpu.memory_space<vmem>>, %arg2: memref<32x16xbf16, #tpu.memory_space<vmem>>, %arg3: memref<32x1xf32, #tpu.memory_space<vmem>>, %arg4: memref<16x32xbf16, #tpu.memory_space<vmem>>, %arg5: memref<16x1xf32, #tpu.memory_space<vmem>>, %arg6: memref<8x16xbf16, #tpu.memory_space<vmem>>, %arg7: memref<8x1xf32, #tpu.memory_space<vmem>>, %arg8: memref<4x8xbf16, #tpu.memory_space<vmem>>, %arg9: memref<4x1xf32, #tpu.memory_space<vmem>>, %arg10: memref<4x8xf32, #tpu.memory_space<vmem>>) attributes {dimension_semantics = [#tpu.dimension_semantics<parallel>], iteration_bounds = array<i64: 1>, scalar_prefetch = 0 : i64, scratch_operands = 0 : i64, tpu.core_type = #tpu.core_type<tc>, window_params = [{transform_indices = @transform_0, window_bounds = array<i64: 8, 16>}, {pipeline_mode = #tpu.pipeline_mode<synchronous>, transform_indices = @transform_1, window_bounds = array<i64: 32, 16>}, {pipeline_mode = #tpu.pipeline_mode<synchronous>, transform_indices = @transform_2, window_bounds = array<i64: 32, 1>}, {pipeline_mode = #tpu.pipeline_mode<synchronous>, transform_indices = @transform_3, window_bounds = array<i64: 16, 32>}, {pipeline_mode = #tpu.pipeline_mode<synchronous>, transform_indices = @transform_4, window_bounds = array<i64: 16, 1>}, {pipeline_mode = #tpu.pipeline_mode<synchronous>, transform_indices = @transform_5, window_bounds = array<i64: 8, 16>}, {pipeline_mode = #tpu.pipeline_mode<synchronous>, transform_indices = @transform_6, window_bounds = array<i64: 8, 1>}, {pipeline_mode = #tpu.pipeline_mode<synchronous>, transform_indices = @transform_7, window_bounds = array<i64: 4, 8>}, {pipeline_mode = #tpu.pipeline_mode<synchronous>, transform_indices = @transform_8, window_bounds = array<i64: 4, 1>}, {transform_indices = @transform_9, window_bounds = array<i64: 4, 8>}]} {
    %c0 = arith.constant 0 : index
    %c0_0 = arith.constant 0 : index
    %0 = vector.load %arg1[%c0, %c0_0] : memref<8x16xf32, #tpu.memory_space<vmem>>, vector<8x16xf32>
    %1 = arith.truncf %0 : vector<8x16xf32> to vector<8x16xbf16>
    %c0_1 = arith.constant 0 : index
    %c0_2 = arith.constant 0 : index
    %2 = vector.load %arg2[%c0_1, %c0_2] : memref<32x16xbf16, #tpu.memory_space<vmem>>, vector<32x16xbf16>
    %cst = arith.constant dense<0.000000e+00> : vector<32x8xf32>
    %3 = tpu.matmul %2, %1, %cst {dimension_numbers = #tpu.dot_dimension_numbers<[1], [1], [0], [0], [0, 0, 1, 0], [], []>} : vector<32x16xbf16>, vector<8x16xbf16>, vector<32x8xf32> -> vector<32x8xf32>
    %c0_3 = arith.constant 0 : index
    %c0_4 = arith.constant 0 : index
    %4 = vector.load %arg3[%c0_3, %c0_4] : memref<32x1xf32, #tpu.memory_space<vmem>>, vector<32x1xf32>
    %5 = vector.broadcast %4 : vector<32x1xf32> to vector<32x8xf32>
    %6 = arith.addf %3, %5 : vector<32x8xf32>
    %7 = math.tanh %6 : vector<32x8xf32>
    %c0_5 = arith.constant 0 : index
    %c0_6 = arith.constant 0 : index
    %8 = vector.load %arg4[%c0_5, %c0_6] : memref<16x32xbf16, #tpu.memory_space<vmem>>, vector<16x32xbf16>
    %9 = arith.truncf %7 : vector<32x8xf32> to vector<32x8xbf16>
    %cst_7 = arith.constant dense<0.000000e+00> : vector<16x8xf32>
    %10 = tpu.matmul %8, %9, %cst_7 {dimension_numbers = #tpu.dot_dimension_numbers<[1], [0], [0], [1], [0, 0, 1, 1], [], []>} : vector<16x32xbf16>, vector<32x8xbf16>, vector<16x8xf32> -> vector<16x8xf32>
    %c0_8 = arith.constant 0 : index
    %c0_9 = arith.constant 0 : index
    %11 = vector.load %arg5[%c0_8, %c0_9] : memref<16x1xf32, #tpu.memory_space<vmem>>, vector<16x1xf32>
    %12 = vector.broadcast %11 : vector<16x1xf32> to vector<16x8xf32>
    %13 = arith.addf %10, %12 : vector<16x8xf32>
    %14 = math.tanh %13 : vector<16x8xf32>
    %c0_10 = arith.constant 0 : index
    %c0_11 = arith.constant 0 : index
    %15 = vector.load %arg6[%c0_10, %c0_11] : memref<8x16xbf16, #tpu.memory_space<vmem>>, vector<8x16xbf16>
    %16 = arith.truncf %14 : vector<16x8xf32> to vector<16x8xbf16>
    %cst_12 = arith.constant dense<0.000000e+00> : vector<8x8xf32>
    %17 = tpu.matmul %15, %16, %cst_12 {dimension_numbers = #tpu.dot_dimension_numbers<[1], [0], [0], [1], [0, 0, 1, 1], [], []>} : vector<8x16xbf16>, vector<16x8xbf16>, vector<8x8xf32> -> vector<8x8xf32>
    %c0_13 = arith.constant 0 : index
    %c0_14 = arith.constant 0 : index
    %18 = vector.load %arg7[%c0_13, %c0_14] : memref<8x1xf32, #tpu.memory_space<vmem>>, vector<8x1xf32>
    %19 = vector.broadcast %18 : vector<8x1xf32> to vector<8x8xf32>
    %20 = arith.addf %17, %19 : vector<8x8xf32>
    %21 = math.tanh %20 : vector<8x8xf32>
    %c0_15 = arith.constant 0 : index
    %c0_16 = arith.constant 0 : index
    %22 = vector.load %arg8[%c0_15, %c0_16] : memref<4x8xbf16, #tpu.memory_space<vmem>>, vector<4x8xbf16>
    %23 = arith.truncf %21 : vector<8x8xf32> to vector<8x8xbf16>
    %cst_17 = arith.constant dense<0.000000e+00> : vector<4x8xf32>
    %24 = tpu.matmul %22, %23, %cst_17 {dimension_numbers = #tpu.dot_dimension_numbers<[1], [0], [0], [1], [0, 0, 1, 1], [], []>} : vector<4x8xbf16>, vector<8x8xbf16>, vector<4x8xf32> -> vector<4x8xf32>
    %c0_18 = arith.constant 0 : index
    %c0_19 = arith.constant 0 : index
    %25 = vector.load %arg9[%c0_18, %c0_19] : memref<4x1xf32, #tpu.memory_space<vmem>>, vector<4x1xf32>
    %26 = vector.broadcast %25 : vector<4x1xf32> to vector<4x8xf32>
    %27 = arith.addf %24, %26 : vector<4x8xf32>
    %28 = vector.extract_strided_slice %27 {offsets = [0, 0], sizes = [1, 8], strides = [1, 1]} : vector<4x8xf32> to vector<1x8xf32>
    %29 = vector.extract_strided_slice %27 {offsets = [1, 0], sizes = [1, 8], strides = [1, 1]} : vector<4x8xf32> to vector<1x8xf32>
    %30 = arith.maximumf %28, %29 : vector<1x8xf32>
    %31 = vector.extract_strided_slice %27 {offsets = [2, 0], sizes = [1, 8], strides = [1, 1]} : vector<4x8xf32> to vector<1x8xf32>
    %32 = arith.maximumf %30, %31 : vector<1x8xf32>
    %33 = vector.extract_strided_slice %27 {offsets = [3, 0], sizes = [1, 8], strides = [1, 1]} : vector<4x8xf32> to vector<1x8xf32>
    %34 = arith.maximumf %32, %33 : vector<1x8xf32>
    %35 = vector.broadcast %34 : vector<1x8xf32> to vector<4x8xf32>
    %36 = arith.subf %27, %35 : vector<4x8xf32>
    %37 = math.exp %36 : vector<4x8xf32>
    %38 = vector.extract_strided_slice %37 {offsets = [0, 0], sizes = [1, 8], strides = [1, 1]} : vector<4x8xf32> to vector<1x8xf32>
    %39 = vector.extract_strided_slice %37 {offsets = [1, 0], sizes = [1, 8], strides = [1, 1]} : vector<4x8xf32> to vector<1x8xf32>
    %40 = arith.addf %38, %39 : vector<1x8xf32>
    %41 = vector.extract_strided_slice %37 {offsets = [2, 0], sizes = [1, 8], strides = [1, 1]} : vector<4x8xf32> to vector<1x8xf32>
    %42 = arith.addf %40, %41 : vector<1x8xf32>
    %43 = vector.extract_strided_slice %37 {offsets = [3, 0], sizes = [1, 8], strides = [1, 1]} : vector<4x8xf32> to vector<1x8xf32>
    %44 = arith.addf %42, %43 : vector<1x8xf32>
    %45 = vector.broadcast %44 : vector<1x8xf32> to vector<4x8xf32>
    %46 = arith.divf %37, %45 : vector<4x8xf32>
    %c0_20 = arith.constant 0 : index
    %c0_21 = arith.constant 0 : index
    %47 = vector.load %arg10[%c0_20, %c0_21] : memref<4x8xf32, #tpu.memory_space<vmem>>, vector<4x8xf32>
    tpu.vector_store %arg10[%c0_20, %c0_21], %46 {strides = array<i32>} : memref<4x8xf32, #tpu.memory_space<vmem>>, vector<4x8xf32>,
    return
  }
  func.func @transform_0(%arg0: i32) -> (i32, i32) {
    %c0_i32 = arith.constant 0 : i32
    %c0_i32_0 = arith.constant 0 : i32
    return %arg0, %c0_i32 : i32, i32
  }
  func.func @transform_1(%arg0: i32) -> (i32, i32) {
    %c0_i32 = arith.constant 0 : i32
    %c0_i32_0 = arith.constant 0 : i32
    %c0_i32_1 = arith.constant 0 : i32
    return %c0_i32, %c0_i32_0 : i32, i32
  }
  func.func @transform_2(%arg0: i32) -> (i32, i32) {
    %c0_i32 = arith.constant 0 : i32
    %c0_i32_0 = arith.constant 0 : i32
    %c0_i32_1 = arith.constant 0 : i32
    return %c0_i32, %c0_i32_0 : i32, i32
  }
  func.func @transform_3(%arg0: i32) -> (i32, i32) {
    %c0_i32 = arith.constant 0 : i32
    %c0_i32_0 = arith.constant 0 : i32
    %c0_i32_1 = arith.constant 0 : i32
    return %c0_i32, %c0_i32_0 : i32, i32
  }
  func.func @transform_4(%arg0: i32) -> (i32, i32) {
    %c0_i32 = arith.constant 0 : i32
    %c0_i32_0 = arith.constant 0 : i32
    %c0_i32_1 = arith.constant 0 : i32
    return %c0_i32, %c0_i32_0 : i32, i32
  }
  func.func @transform_5(%arg0: i32) -> (i32, i32) {
    %c0_i32 = arith.constant 0 : i32
    %c0_i32_0 = arith.constant 0 : i32
    %c0_i32_1 = arith.constant 0 : i32
    return %c0_i32, %c0_i32_0 : i32, i32
  }
  func.func @transform_6(%arg0: i32) -> (i32, i32) {
    %c0_i32 = arith.constant 0 : i32
    %c0_i32_0 = arith.constant 0 : i32
    %c0_i32_1 = arith.constant 0 : i32
    return %c0_i32, %c0_i32_0 : i32, i32
  }
  func.func @transform_7(%arg0: i32) -> (i32, i32) {
    %c0_i32 = arith.constant 0 : i32
    %c0_i32_0 = arith.constant 0 : i32
    %c0_i32_1 = arith.constant 0 : i32
    return %c0_i32, %c0_i32_0 : i32, i32
  }
  func.func @transform_8(%arg0: i32) -> (i32, i32) {
    %c0_i32 = arith.constant 0 : i32
    %c0_i32_0 = arith.constant 0 : i32
    %c0_i32_1 = arith.constant 0 : i32
    return %c0_i32, %c0_i32_0 : i32, i32
  }
  func.func @transform_9(%arg0: i32) -> (i32, i32) {
    %c0_i32 = arith.constant 0 : i32
    %c0_i32_0 = arith.constant 0 : i32
    return %c0_i32, %arg0 : i32, i32
  }
}

</mosaic_0001>

<llo_original>
// kernel: tpu_custom_call.1
$region0: #{tpu_custom_call.1}
  #allocation0 [shape = 'u32[]', space=smem, size = 0x4, offset = 0x4, fixed_abs, tag = 'smem constant byte address 0x4 - core index']
  #allocation1 [shape = 'u32[144,128]{1,0:T(1,128)}', space=vmem, size = 0x12000, scoped, tag = 'internal scratch']
  %s0 = inlined_call_operand.vmem [shape: f32[8,16], index: 0, kind: input, shape index: {}]
  %s1 = inlined_call_operand.vmem [shape: bf16[32,16], index: 1, kind: input, shape index: {}]
  %s2 = inlined_call_operand.vmem [shape: f32[32,1], index: 2, kind: input, shape index: {}]
  %s3 = inlined_call_operand.vmem [shape: bf16[16,32], index: 3, kind: input, shape index: {}]
  %s4 = inlined_call_operand.vmem [shape: f32[16,1], index: 4, kind: input, shape index: {}]
  %s5 = inlined_call_operand.vmem [shape: bf16[8,16], index: 5, kind: input, shape index: {}]
  %s6 = inlined_call_operand.vmem [shape: f32[8,1], index: 6, kind: input, shape index: {}]
  %s7 = inlined_call_operand.vmem [shape: bf16[4,8], index: 7, kind: input, shape index: {}]
  %s8 = inlined_call_operand.vmem [shape: f32[4,1], index: 8, kind: input, shape index: {}]
  %s9 = inlined_call_operand.hbm [shape: f32[4,8], index: 9, kind: output, shape index: {}]
  %s10 = sld [smem:[#allocation0]]
  $region46: #{tpu_custom_call.1} parent=0
    _
  %s12 = ssub.s32 1, %s10
  %s13 = scalar_select 0, %s12, %s10
  $region1: #{tpu_custom_call.1} parent=0
    #allocation2 [shape = 'u8[2048]{0}', space=vmem, size = 0x800, scoped, tag = 'output window, operand 0, single buffered']
    #allocation3 [shape = 's32[1]{0}', space=sflag, size = 0x4, scoped, tag = 'scoped memory for tpu_custom_call.1']
    %14 = vsyncpa [#allocation3], 0
    // Predicated region
    $region2: #{tpu_custom_call.1} parent=1 // pred_check
      _
    $region3: #{tpu_custom_call.1} parent=1 // pred_check_branch
      %16 = sbr.rel (0) target = $region5
    $region4: #{tpu_custom_call.1} parent=1 // pred_region
      _
    $region5: #{tpu_custom_call.1} parent=1 // pred_fallthru
      _
    // Predicated region
    $region6: #{tpu_custom_call.1} parent=1 // pred_check
      _
    $region7: #{tpu_custom_call.1} parent=1 // pred_check_branch
      %18 = sbr.rel (0) target = $region9
    $region8: #{tpu_custom_call.1} parent=1 // pred_region
      _
    $region9: #{tpu_custom_call.1} parent=1 // pred_fallthru
      _
    // Predicated region
    $region10: #{tpu_custom_call.1} parent=1 // pred_check
      _
    $region11: #{tpu_custom_call.1} parent=1 // pred_check_branch
      %20 = sbr.rel (0) target = $region13
    $region12: #{tpu_custom_call.1} parent=1 // pred_region
      _
    $region13: #{tpu_custom_call.1} parent=1 // pred_fallthru
      _
    // Predicated region
    $region14: #{tpu_custom_call.1} parent=1 // pred_check
      _
    $region15: #{tpu_custom_call.1} parent=1 // pred_check_branch
      %22 = sbr.rel (0) target = $region17
    $region16: #{tpu_custom_call.1} parent=1 // pred_region
      _
    $region17: #{tpu_custom_call.1} parent=1 // pred_fallthru
      _
    // Predicated region
    $region18: #{tpu_custom_call.1} parent=1 // pred_check
      _
    $region19: #{tpu_custom_call.1} parent=1 // pred_check_branch
      %24 = sbr.rel (0) target = $region21
    $region20: #{tpu_custom_call.1} parent=1 // pred_region
      _
    $region21: #{tpu_custom_call.1} parent=1 // pred_fallthru
      _
    // Predicated region
    $region22: #{tpu_custom_call.1} parent=1 // pred_check
      _
    $region23: #{tpu_custom_call.1} parent=1 // pred_check_branch
      %26 = sbr.rel (0) target = $region25
    $region24: #{tpu_custom_call.1} parent=1 // pred_region
      _
    $region25: #{tpu_custom_call.1} parent=1 // pred_fallthru
      _
    // Predicated region
    $region26: #{tpu_custom_call.1} parent=1 // pred_check
      _
    $region27: #{tpu_custom_call.1} parent=1 // pred_check_branch
      %28 = sbr.rel (0) target = $region29
    $region28: #{tpu_custom_call.1} parent=1 // pred_region
      _
    $region29: #{tpu_custom_call.1} parent=1 // pred_fallthru
      _
    // Predicated region
    $region30: #{tpu_custom_call.1} parent=1 // pred_check
      _
    $region31: #{tpu_custom_call.1} parent=1 // pred_check_branch
      %30 = sbr.rel (0) target = $region33
    $region32: #{tpu_custom_call.1} parent=1 // pred_region
      _
    $region33: #{tpu_custom_call.1} parent=1 // pred_fallthru
      _
    // Predicated region
    $region34: #{tpu_custom_call.1} parent=1 // pred_check
      _
    $region35: #{tpu_custom_call.1} parent=1 // pred_check_branch
      %32 = sbr.rel (0) target = $region37
    $region36: #{tpu_custom_call.1} parent=1 // pred_region
      _
    $region37: #{tpu_custom_call.1} parent=1 // pred_fallthru
      _
    %v34 = vld [vmem:[%s0] sm:$0xff]
    %v35 = vpack.c.bf16 %v34, %v34
    %v36 = vld [vmem:[%s1] sm:$0xf]
    %v37 = vld [vmem:[%s1 + $0x4] sm:$0xf]
    %v38 = vld [vmem:[%s1 + $0x8] sm:$0xf]
    %v39 = vld [vmem:[%s1 + $0xc] sm:$0xf]
    %v40 = vld [vmem:[%s2] sm:$0xff]
    %v41 = vld [vmem:[%s2 + $0x8] sm:$0xff]
    %v42 = vld [vmem:[%s2 + $0x10] sm:$0xff]
    %v43 = vld [vmem:[%s2 + $0x18] sm:$0xff]
    %45 = vset.pattern.permute.xlu0 0
    %46 = vperm.xlu0 %45, %v40
    %v47 = vpop.permute.xlu0 %46
    %50 = vset.pattern.permute.xlu0 0
    %51 = vperm.xlu0 %50, %v41
    %v52 = vpop.permute.xlu0 %51
    %55 = vset.pattern.permute.xlu0 0
    %56 = vperm.xlu0 %55, %v42
    %v57 = vpop.permute.xlu0 %56
    %60 = vset.pattern.permute.xlu0 0
    %61 = vperm.xlu0 %60, %v43
    %v62 = vpop.permute.xlu0 %61
    %v68 = vunpack.c.l.b16 %v36
    %v69 = vunpack.c.l.b16 %v37
    %v70 = vunpack.c.l.b16 %v38
    %v71 = vunpack.c.l.b16 %v39
    %v72 = vpack.c.b16 %v69, %v68
    %v73 = vpack.c.b16 %v71, %v70
    %vm74 = vcmask 130048
    %v76 = vsel %vm74, %v72, 0
    %v79 = vsel %vm74, %v73, 0
    %v82 = vsel %vm74, %v35, 0
    %84 = vmatprep.subr.bf16.mxu0 0
    %85 = vmatpush1.bf16.xpose.msra.mxu0 %v82
    %86 = vmatprep.subr.bf16.mxu0 0
    %87 = vmatpush1.bf16.xpose.msra.mxu0 0
    %88 = vmatprep.subr.bf16.mxu0 0
    %89 = vmatpush1.bf16.xpose.msra.mxu0 0
    %90 = vmatprep.subr.bf16.mxu0 0
    %91 = vmatpush1.bf16.xpose.msra.mxu0 0
    %92 = vmatprep.subr.bf16.mxu0 0
    %93 = vmatpush1.bf16.xpose.msra.mxu0 0
    %94 = vmatprep.subr.bf16.mxu0 0
    %95 = vmatpush1.bf16.xpose.msra.mxu0 0
    %96 = vmatprep.subr.bf16.mxu0 0
    %97 = vmatpush1.bf16.xpose.msra.mxu0 0
    %98 = vmatprep.subr.bf16.mxu0 0
    %99 = vmatpush1.bf16.xpose.msra.mxu0 0
    %100 = vmatprep.subr.bf16.mxu0 0
    %101 = vmatpush1.bf16.xpose.msra.mxu0 0
    %102 = vmatprep.subr.bf16.mxu0 0
    %103 = vmatpush1.bf16.xpose.msra.mxu0 0
    %104 = vmatprep.subr.bf16.mxu0 0
    %105 = vmatpush1.bf16.xpose.msra.mxu0 0
    %106 = vmatprep.subr.bf16.mxu0 0
    %107 = vmatpush1.bf16.xpose.msra.mxu0 0
    %108 = vmatprep.subr.bf16.mxu0 0
    %109 = vmatpush1.bf16.xpose.msra.mxu0 0
    %110 = vmatprep.subr.bf16.mxu0 0
    %111 = vmatpush1.bf16.xpose.msra.mxu0 0
    %112 = vmatprep.subr.bf16.mxu0 0
    %113 = vmatpush1.bf16.xpose.msra.mxu0 0
    %114 = vmatprep.subr.bf16.mxu0 0
    %115 = vmatpush1.bf16.xpose.msra.mxu0 0
    %116 = vmatprep.mubr.bf16.mxu0 0
    %117 = vmatmul.mubr.bf16.gmra.mrb[0].mxu0 %v76
    %v118 = vpop.f32.mrb[0].mxu0
    %v119 = vadd.f32 %v47, %v118
    %v120 = vpop.f32.mrb[0].mxu0
    %v121 = vpop.f32.mrb[0].mxu0
    %v122 = vadd.f32 %v52, %v121
    %v123 = vpop.f32.mrb[0].mxu0
    %124 = vmatprep.mubr.bf16.mxu0 0
    %125 = vmatmul.mubr.bf16.gmra.mrb[0].mxu0 %v79
    %v126 = vpop.f32.mrb[0].mxu0
    %v127 = vadd.f32 %v57, %v126
    %v128 = vpop.f32.mrb[0].mxu0
    %v129 = vpop.f32.mrb[0].mxu0
    %v130 = vadd.f32 %v62, %v129
    %v131 = vpop.f32.mrb[0].mxu0
    %132 = vdwg.mxu0
    %v133 = vtanh.pop %v119
    %v134 = vtanh.pop %v122
    %v135 = vtanh.pop %v127
    %v136 = vtanh.pop %v130
    %v137 = vld [vmem:[%s3] sm:$0xf]
    %v138 = vld [vmem:[%s3 + $0x4] sm:$0xf]
    %v139 = vpack.c.bf16 %v134, %v133
    %v140 = vpack.c.bf16 %v136, %v135
    %v141 = vld [vmem:[%s4] sm:$0xff]
    %v142 = vld [vmem:[%s4 + $0x8] sm:$0xff]
    %144 = vset.pattern.permute.xlu0 0
    %145 = vperm.xlu0 %144, %v141
    %v146 = vpop.permute.xlu0 %145
    %149 = vset.pattern.permute.xlu0 0
    %150 = vperm.xlu0 %149, %v142
    %v151 = vpop.permute.xlu0 %150
    %v155 = vunpack.c.l.b16 %v137
    %v156 = vunpack.c.l.b16 %v138
    %v157 = vpack.c.b16 %v156, %v155
    %vm158 = vcmask 261120
    %v160 = vsel %vm158, %v157, 0
    %162 = vmatprep.subr.bf16.mxu0 0
    %163 = vmatpush1.bf16.msra.mxu0 %v139
    %164 = vmatprep.subr.bf16.mxu0 0
    %165 = vmatpush1.bf16.msra.mxu0 %v140
    %166 = vmatprep.subr.bf16.mxu0 0
    %167 = vmatpush1.bf16.msra.mxu0 0
    %168 = vmatprep.subr.bf16.mxu0 0
    %169 = vmatpush1.bf16.msra.mxu0 0
    %170 = vmatprep.subr.bf16.mxu0 0
    %171 = vmatpush1.bf16.msra.mxu0 0
    %172 = vmatprep.subr.bf16.mxu0 0
    %173 = vmatpush1.bf16.msra.mxu0 0
    %174 = vmatprep.subr.bf16.mxu0 0
    %175 = vmatpush1.bf16.msra.mxu0 0
    %176 = vmatprep.subr.bf16.mxu0 0
    %177 = vmatpush1.bf16.msra.mxu0 0
    %178 = vmatprep.subr.bf16.mxu0 0
    %179 = vmatpush1.bf16.msra.mxu0 0
    %180 = vmatprep.subr.bf16.mxu0 0
    %181 = vmatpush1.bf16.msra.mxu0 0
    %182 = vmatprep.subr.bf16.mxu0 0
    %183 = vmatpush1.bf16.msra.mxu0 0
    %184 = vmatprep.subr.bf16.mxu0 0
    %185 = vmatpush1.bf16.msra.mxu0 0
    %186 = vmatprep.subr.bf16.mxu0 0
    %187 = vmatpush1.bf16.msra.mxu0 0
    %188 = vmatprep.subr.bf16.mxu0 0
    %189 = vmatpush1.bf16.msra.mxu0 0
    %190 = vmatprep.subr.bf16.mxu0 0
    %191 = vmatpush1.bf16.msra.mxu0 0
    %192 = vmatprep.subr.bf16.mxu0 0
    %193 = vmatpush1.bf16.msra.mxu0 0
    %194 = vmatprep.mubr.bf16.mxu0 0
    %195 = vmatmul.mubr.bf16.gmra.mrb[0].mxu0 %v160
    %v196 = vpop.f32.mrb[0].mxu0
    %v197 = vadd.f32 %v146, %v196
    %v198 = vpop.f32.mrb[0].mxu0
    %v199 = vpop.f32.mrb[0].mxu0
    %v200 = vadd.f32 %v151, %v199
    %v201 = vpop.f32.mrb[0].mxu0
    %202 = vdwg.mxu0
    %v203 = vtanh.pop %v197
    %v204 = vtanh.pop %v200
    %v205 = vld [vmem:[%s5] sm:$0xf]
    %v206 = vpack.c.bf16 %v204, %v203
    %v207 = vld [vmem:[%s6] sm:$0xff]
    %209 = vset.pattern.permute.xlu0 0
    %210 = vperm.xlu0 %209, %v207
    %v211 = vpop.permute.xlu0 %210
    %v214 = vsel %vm74, %v205, 0
    %216 = vmatprep.subr.bf16.mxu0 0
    %217 = vmatpush1.bf16.msra.mxu0 %v206
    %218 = vmatprep.subr.bf16.mxu0 0
    %219 = vmatpush1.bf16.msra.mxu0 0
    %220 = vmatprep.subr.bf16.mxu0 0
    %221 = vmatpush1.bf16.msra.mxu0 0
    %222 = vmatprep.subr.bf16.mxu0 0
    %223 = vmatpush1.bf16.msra.mxu0 0
    %224 = vmatprep.subr.bf16.mxu0 0
    %225 = vmatpush1.bf16.msra.mxu0 0
    %226 = vmatprep.subr.bf16.mxu0 0
    %227 = vmatpush1.bf16.msra.mxu0 0
    %228 = vmatprep.subr.bf16.mxu0 0
    %229 = vmatpush1.bf16.msra.mxu0 0
    %230 = vmatprep.subr.bf16.mxu0 0
    %231 = vmatpush1.bf16.msra.mxu0 0
    %232 = vmatprep.subr.bf16.mxu0 0
    %233 = vmatpush1.bf16.msra.mxu0 0
    %234 = vmatprep.subr.bf16.mxu0 0
    %235 = vmatpush1.bf16.msra.mxu0 0
    %236 = vmatprep.subr.bf16.mxu0 0
    %237 = vmatpush1.bf16.msra.mxu0 0
    %238 = vmatprep.subr.bf16.mxu0 0
    %239 = vmatpush1.bf16.msra.mxu0 0
    %240 = vmatprep.subr.bf16.mxu0 0
    %241 = vmatpush1.bf16.msra.mxu0 0
    %242 = vmatprep.subr.bf16.mxu0 0
    %243 = vmatpush1.bf16.msra.mxu0 0
    %244 = vmatprep.subr.bf16.mxu0 0
    %245 = vmatpush1.bf16.msra.mxu0 0
    %246 = vmatprep.subr.bf16.mxu0 0
    %247 = vmatpush1.bf16.msra.mxu0 0
    %248 = vmatprep.mubr.bf16.mxu0 0
    %249 = vmatmul.mubr.bf16.gmra.mrb[0].mxu0 %v214
    %v250 = vpop.f32.mrb[0].mxu0
    %v251 = vadd.f32 %v211, %v250
    %v252 = vpop.f32.mrb[0].mxu0
    %v253 = vpop.f32.mrb[0].mxu0
    %v254 = vpop.f32.mrb[0].mxu0
    %255 = vdwg.mxu0
    %v256 = vtanh.pop %v251
    %v257 = vld [vmem:[%s7] sm:$0x3]
    %v258 = vpack.c.bf16 %v256, %v256
    %v259 = vld [vmem:[%s8] sm:$0xf]
    %261 = vset.pattern.permute.xlu0 0
    %262 = vperm.xlu0 %261, %v259
    %v263 = vpop.permute.xlu0 %262
    %vm265 = vcmask 64512
    %v267 = vsel %vm265, %v257, 0
    %vm269 = vcmask 1043456
    %v271 = vsel %vm269, %v258, 0
    %273 = vmatprep.subr.bf16.mxu0 0
    %274 = vmatpush1.bf16.msra.mxu0 %v271
    %275 = vmatprep.subr.bf16.mxu0 0
    %276 = vmatpush1.bf16.msra.mxu0 0
    %277 = vmatprep.subr.bf16.mxu0 0
    %278 = vmatpush1.bf16.msra.mxu0 0
    %279 = vmatprep.subr.bf16.mxu0 0
    %280 = vmatpush1.bf16.msra.mxu0 0
    %281 = vmatprep.subr.bf16.mxu0 0
    %282 = vmatpush1.bf16.msra.mxu0 0
    %283 = vmatprep.subr.bf16.mxu0 0
    %284 = vmatpush1.bf16.msra.mxu0 0
    %285 = vmatprep.subr.bf16.mxu0 0
    %286 = vmatpush1.bf16.msra.mxu0 0
    %287 = vmatprep.subr.bf16.mxu0 0
    %288 = vmatpush1.bf16.msra.mxu0 0
    %289 = vmatprep.subr.bf16.mxu0 0
    %290 = vmatpush1.bf16.msra.mxu0 0
    %291 = vmatprep.subr.bf16.mxu0 0
    %292 = vmatpush1.bf16.msra.mxu0 0
    %293 = vmatprep.subr.bf16.mxu0 0
    %294 = vmatpush1.bf16.msra.mxu0 0
    %295 = vmatprep.subr.bf16.mxu0 0
    %296 = vmatpush1.bf16.msra.mxu0 0
    %297 = vmatprep.subr.bf16.mxu0 0
    %298 = vmatpush1.bf16.msra.mxu0 0
    %299 = vmatprep.subr.bf16.mxu0 0
    %300 = vmatpush1.bf16.msra.mxu0 0
    %301 = vmatprep.subr.bf16.mxu0 0
    %302 = vmatpush1.bf16.msra.mxu0 0
    %303 = vmatprep.subr.bf16.mxu0 0
    %304 = vmatpush1.bf16.msra.mxu0 0
    %305 = vmatprep.mubr.bf16.mxu0 0
    %306 = vmatmul.mubr.bf16.gmra.mrb[0].mxu0 %v267
    %v307 = vpop.f32.mrb[0].mxu0
    %v308 = vadd.f32 %v263, %v307
    %v309 = vpop.f32.mrb[0].mxu0
    %v310 = vpop.f32.mrb[0].mxu0
    %v311 = vpop.f32.mrb[0].mxu0
    %312 = vdwg.mxu0
    %v314 = vrot.slane %v308, 1
    %v316 = vmax.f32 %v308, %v314
    %v317 = vrot.slane %v308, 2
    %v319 = vmax.f32 %v316, %v317
    %v320 = vrot.slane %v308, 3
    %v322 = vmax.f32 %v319, %v320
    %v323 = vlaneseq
    %v324 = vshrl.u32 %v323, 7
    %v325 = vsub.s32 0, %v324
    %v326 = vrot.slane %v322, %v325
    %v327 = vsub.f32 %v308, %v326
    %v328 = vmul.f32 %v327, 1.442695
    %v329 = vpow.pop %v328
    %v331 = vrot.slane %v329, 1
    %v333 = vadd.f32 %v329, %v331
    %v334 = vrot.slane %v329, 2
    %v336 = vadd.f32 %v333, %v334
    %v337 = vrot.slane %v329, 3
    %v339 = vadd.f32 %v336, %v337
    %v340 = vlaneseq
    %v341 = vshrl.u32 %v340, 7
    %v342 = vsub.s32 0, %v341
    %v343 = vrot.slane %v339, %v342
    %v344 = vrcp.pop %v343
    %v345 = vmul.f32 %v329, %v344
    %vm346 = vcmask 60416
    %347 = vst.msk [vmem:[#allocation2] sm:$0xf] %vm346, %v345
    // Predicated region
    $region38: #{tpu_custom_call.1} parent=1 // pred_check
      _
    $region39: #{tpu_custom_call.1} parent=1 // pred_check_branch
      %349 = sbr.rel (0) target = $region41
    $region40: #{tpu_custom_call.1} parent=1 // pred_region
      %s351 = ssub.s32 64, 64
      %352 = vsyncadd [#allocation3], %s351
      %s354 = sshll.u32 [#allocation2], 4
      %s355 = int_to_ptr.vmem [resolvable:$true] %s354
      %357 = dma.vmem_to_hbm [thread:$0]  %s355, 64, %s9, [#allocation3]
    $region41: #{tpu_custom_call.1} parent=1 // pred_fallthru
      _
    // Predicated region
    $region42: #{tpu_custom_call.1} parent=1 // pred_check
      _
    $region43: #{tpu_custom_call.1} parent=1 // pred_check_branch
      %359 = sbr.rel (0) target = $region45
    $region44: #{tpu_custom_call.1} parent=1 // pred_region
      %360 = dma.done [#allocation3], 64
    $region45: #{tpu_custom_call.1} parent=1 // pred_fallthru
      _
    %361 = vsyncpa [#allocation3], 1

</llo_original>
